<compile_context>
chip_gen: v7x
topology: tpu7x:2x2x1
jax: 0.10.0
libtpu: 0.0.40
codegen_flags: <defaults>
</compile_context>

<pallas_src>
import functools

import jax
import jax.numpy as jnp
from jax.experimental import pallas as pl
from jax.experimental.pallas import tpu as pltpu


def _round_up(x, m):
    return ((x + m - 1) // m) * m


def depth_noise_kernel(any_ref, u1_ref, u2_ref, x_ref, o_ref, *, std):
    """One (bn batch elems) x (tile_hw spatial slab) block.

    any_ref : SMEM int32 (num_batch_blocks,)  -- 1 if any element in this
              batch block has its noise gate on.
    u1_ref  : VMEM f32 (bn, 1, tile_hw // 2) uniforms in [0, 1); rows of
              gated-off batch elements are exactly 0 (=> noise exactly 0).
    u2_ref  : VMEM f32 (bn, 1, tile_hw // 2) uniforms in [0, 1).
    x_ref   : VMEM (bn, c, tile_hw) depths slab.
    o_ref   : VMEM (bn, c, tile_hw) output slab.
    """
    i = pl.program_id(0)

    @pl.when(any_ref[i] == 0)
    def _():
        # Whole batch block gated off -> pure copy, no EUP/VPU noise work.
        o_ref[...] = x_ref[...]

    @pl.when(any_ref[i] != 0)
    def _():
        # Box-Muller, using BOTH outputs (cos and sin) so only tile_hw/2
        # uniform pairs are needed per tile_hw noise values.
        u1 = 1.0 - u1_ref[...]                 # (bn, 1, half) in (0, 1]; gated-off rows are 1.0
        u2 = u2_ref[...]                       # (bn, 1, half)
        r = jnp.sqrt(-2.0 * jnp.log(u1))       # gated-off rows: r == 0 -> noise == 0
        theta = (2.0 * jnp.pi) * u2
        z = jnp.concatenate([r * jnp.cos(theta), r * jnp.sin(theta)], axis=-1)  # (bn, 1, tile_hw)

        # Add in f32 (exact vs. the reference even for low-precision inputs),
        # broadcasting the per-batch-element noise map over the channel axis.
        x = x_ref[...].astype(jnp.float32)
        o_ref[...] = (x + jnp.float32(std) * z).astype(o_ref.dtype)


def depth_noise(depths, key, *, std=0.005, prob=1.0):
    n, c, h, w = depths.shape
    hw = h * w

    # ---- Lane-dense flattened layout + spatial slab tiling -----------------
    # tile_hw is a multiple of 256 so the half-size uniform blocks stay
    # 128-lane aligned; capped so per-step blocks stay small (v7x VMEM).
    max_tile_hw = 64 * 1024                       # 256 KiB f32 per channel per elem
    tile_hw = min(_round_up(hw, 256), max_tile_hw)
    hw_pad = _round_up(hw, tile_hw)
    nj = hw_pad // tile_hw

    # Group batch elements per grid step for small images (amortize per-step
    # overhead) while keeping each block <= ~2 MiB so double buffering of
    # in + out fits comfortably in scoped VMEM on every generation.
    max_block_bytes = 2 * 1024 * 1024
    bn = 1
    for d in range(1, n + 1):
        if n % d == 0 and d * c * tile_hw * 4 <= max_block_bytes:
            bn = d
    nb = n // bn

    # ---- Randomness (wrapper-side; kernel does the transform) --------------
    k_apply, k_u1, k_u2 = jax.random.split(key, 3)
    apply_noise = jax.random.uniform(k_apply, (n,)) < prob                # (n,)
    half = hw_pad // 2
    u1 = jax.random.uniform(k_u1, (n, 1, half), dtype=jnp.float32)
    u2 = jax.random.uniform(k_u2, (n, 1, half), dtype=jnp.float32)
    # Per-element gate: zeroing u1 makes Box-Muller emit exactly 0 noise
    # (r = sqrt(-2*log(1)) = 0) for that batch element.
    u1 = jnp.where(apply_noise[:, None, None], u1, 0.0)
    # Per-batch-block "any element gets noise" flag for the pl.when fast path.
    block_any = jnp.any(apply_noise.reshape(nb, bn), axis=1).astype(jnp.int32)

    x = depths.reshape(n, c, hw)
    if hw_pad != hw:
        x = jnp.pad(x, ((0, 0), (0, 0), (0, hw_pad - hw)))

    kernel = functools.partial(depth_noise_kernel, std=std)
    tile_half = tile_hw // 2

    out = pl.pallas_call(
        kernel,
        out_shape=jax.ShapeDtypeStruct((n, c, hw_pad), depths.dtype),
        grid_spec=pltpu.PrefetchScalarGridSpec(
            num_scalar_prefetch=1,
            grid=(nb, nj),
            in_specs=[
                pl.BlockSpec((bn, 1, tile_half), lambda i, j, anyb: (i, 0, j)),
                pl.BlockSpec((bn, 1, tile_half), lambda i, j, anyb: (i, 0, j)),
                pl.BlockSpec((bn, c, tile_hw), lambda i, j, anyb: (i, 0, j)),
            ],
            out_specs=pl.BlockSpec((bn, c, tile_hw), lambda i, j, anyb: (i, 0, j)),
        ),
        compiler_params=pltpu.CompilerParams(
            # No cross-step state (no stateful PRNG anymore) -> both axes can
            # shard across v7x's two TensorCores; neutral on v5e/v6e.
            dimension_semantics=("parallel", "parallel"),
            # Helps v5e's smaller default scoped-VMEM limit; no-op elsewhere.
            vmem_limit_bytes=32 * 1024 * 1024,
        ),
    )(block_any, u1, u2, x)

    if hw_pad != hw:
        out = out[:, :, :hw]
    return out.reshape(n, c, h, w)


if __name__ == "__main__":
    key = jax.random.PRNGKey(0)
    k_x, k_n1, k_n2 = jax.random.split(key, 3)

    # Small shapes consistent with the module: batch=2, channels=4, spatial=16.
    depths = jax.random.uniform(k_x, (2, 4, 16, 16), dtype=jnp.float32)

    out = depth_noise(depths, k_n1, std=0.005, prob=1.0)
    out = jax.block_until_ready(out)
    assert out.shape == depths.shape and out.dtype == depths.dtype

    delta = out - depths
    # With prob=1.0 noise is applied to every batch element; per-batch noise is
    # shared across channels, so (out - depths) must be channel-invariant.
    assert jnp.allclose(delta[:, 0], delta[:, 1], atol=1e-6)
    # Noise magnitude sanity check (std=0.005) and that noise was applied.
    assert float(jnp.abs(delta).max()) < 0.05
    assert float(jnp.abs(delta).max()) > 0.0

    # prob=0.0 -> every gate off -> exact passthrough via the pl.when copy path.
    out0 = jax.block_until_ready(depth_noise(depths, k_n2, std=0.005, prob=0.0))
    assert bool(jnp.all(out0 == depths))

    print("KERNEL_OK")
</pallas_src>

<mosaic_0001>
module attributes {stable_mosaic.version = 11 : i64} {
  func.func @depth_noise_kernel(%arg0: i32, %arg1: i32, %arg2: memref<1xi32, #tpu.memory_space<smem>>, %arg3: memref<2x1x128xf32, #tpu.memory_space<vmem>>, %arg4: memref<2x1x128xf32, #tpu.memory_space<vmem>>, %arg5: memref<2x4x256xf32, #tpu.memory_space<vmem>>, %arg6: memref<2x4x256xf32, #tpu.memory_space<vmem>>) attributes {dimension_semantics = [#tpu.dimension_semantics<parallel>, #tpu.dimension_semantics<parallel>], iteration_bounds = array<i64: 1, 1>, scalar_prefetch = 1 : i64, scratch_operands = 0 : i64, tpu.core_type = #tpu.core_type<tc>, window_params = [{transform_indices = @transform_0, window_bounds = array<i64: 2, 1, 128>}, {transform_indices = @transform_1, window_bounds = array<i64: 2, 1, 128>}, {transform_indices = @transform_2, window_bounds = array<i64: 2, 4, 256>}, {transform_indices = @transform_3, window_bounds = array<i64: 2, 4, 256>}]} {
    %0 = arith.index_cast %arg0 : i32 to index
    %1 = memref.load %arg2[%0] : memref<1xi32, #tpu.memory_space<smem>>
    %c0_i32 = arith.constant 0 : i32
    %2 = arith.cmpi eq, %1, %c0_i32 : i32
    %3 = arith.extui %2 : i1 to i32
    %c0_i32_0 = arith.constant 0 : i32
    %4 = arith.cmpi ne, %3, %c0_i32_0 : i32
    scf.if %4 {
      %c0 = arith.constant 0 : index
      %c0_3 = arith.constant 0 : index
      %c0_4 = arith.constant 0 : index
      %10 = vector.load %arg5[%c0, %c0_3, %c0_4] : memref<2x4x256xf32, #tpu.memory_space<vmem>>, vector<2x4x256xf32>
      %c0_5 = arith.constant 0 : index
      %c0_6 = arith.constant 0 : index
      %c0_7 = arith.constant 0 : index
      %11 = vector.load %arg6[%c0_5, %c0_6, %c0_7] : memref<2x4x256xf32, #tpu.memory_space<vmem>>, vector<2x4x256xf32>
      tpu.vector_store %arg6[%c0_5, %c0_6, %c0_7], %10 {strides = array<i32>} : memref<2x4x256xf32, #tpu.memory_space<vmem>>, vector<2x4x256xf32>,
    } else {
    }
    %5 = arith.index_cast %arg0 : i32 to index
    %6 = memref.load %arg2[%5] : memref<1xi32, #tpu.memory_space<smem>>
    %c0_i32_1 = arith.constant 0 : i32
    %7 = arith.cmpi ne, %6, %c0_i32_1 : i32
    %8 = arith.extui %7 : i1 to i32
    %c0_i32_2 = arith.constant 0 : i32
    %9 = arith.cmpi ne, %8, %c0_i32_2 : i32
    scf.if %9 {
      %c0 = arith.constant 0 : index
      %c0_3 = arith.constant 0 : index
      %c0_4 = arith.constant 0 : index
      %10 = vector.load %arg3[%c0, %c0_3, %c0_4] : memref<2x1x128xf32, #tpu.memory_space<vmem>>, vector<2x1x128xf32>
      %cst = arith.constant 1.000000e+00 : f32
      %11 = vector.broadcast %cst : f32 to vector<2x1x128xf32>
      %12 = arith.subf %11, %10 : vector<2x1x128xf32>
      %c0_5 = arith.constant 0 : index
      %c0_6 = arith.constant 0 : index
      %c0_7 = arith.constant 0 : index
      %13 = vector.load %arg4[%c0_5, %c0_6, %c0_7] : memref<2x1x128xf32, #tpu.memory_space<vmem>>, vector<2x1x128xf32>
      %14 = math.log %12 : vector<2x1x128xf32>
      %cst_8 = arith.constant -2.000000e+00 : f32
      %15 = vector.broadcast %cst_8 : f32 to vector<2x1x128xf32>
      %16 = arith.mulf %15, %14 : vector<2x1x128xf32>
      %17 = math.sqrt %16 : vector<2x1x128xf32>
      %cst_9 = arith.constant 6.28318548 : f32
      %18 = vector.broadcast %cst_9 : f32 to vector<2x1x128xf32>
      %19 = arith.mulf %18, %13 : vector<2x1x128xf32>
      %20 = math.cos %19 : vector<2x1x128xf32>
      %21 = arith.mulf %17, %20 : vector<2x1x128xf32>
      %22 = math.sin %19 : vector<2x1x128xf32>
      %23 = arith.mulf %17, %22 : vector<2x1x128xf32>
      %24 = tpu.concatenate %21, %23 in 2 : vector<2x1x128xf32>, vector<2x1x128xf32> -> vector<2x1x256xf32>
      %c0_10 = arith.constant 0 : index
      %c0_11 = arith.constant 0 : index
      %c0_12 = arith.constant 0 : index
      %25 = vector.load %arg5[%c0_10, %c0_11, %c0_12] : memref<2x4x256xf32, #tpu.memory_space<vmem>>, vector<2x4x256xf32>
      %cst_13 = arith.constant 5.000000e-03 : f32
      %26 = vector.broadcast %cst_13 : f32 to vector<2x1x256xf32>
      %27 = arith.mulf %26, %24 : vector<2x1x256xf32>
      %28 = vector.broadcast %27 : vector<2x1x256xf32> to vector<2x4x256xf32>
      %29 = arith.addf %25, %28 : vector<2x4x256xf32>
      %c0_14 = arith.constant 0 : index
      %c0_15 = arith.constant 0 : index
      %c0_16 = arith.constant 0 : index
      %30 = vector.load %arg6[%c0_14, %c0_15, %c0_16] : memref<2x4x256xf32, #tpu.memory_space<vmem>>, vector<2x4x256xf32>
      tpu.vector_store %arg6[%c0_14, %c0_15, %c0_16], %29 {strides = array<i32>} : memref<2x4x256xf32, #tpu.memory_space<vmem>>, vector<2x4x256xf32>,
    } else {
    }
    return
  }
  func.func @transform_0(%arg0: i32, %arg1: i32, %arg2: memref<1xi32, #tpu.memory_space<smem>>) -> (i32, i32, i32) {
    %c0_i32 = arith.constant 0 : i32
    %c0_i32_0 = arith.constant 0 : i32
    return %arg0, %c0_i32, %arg1 : i32, i32, i32
  }
  func.func @transform_1(%arg0: i32, %arg1: i32, %arg2: memref<1xi32, #tpu.memory_space<smem>>) -> (i32, i32, i32) {
    %c0_i32 = arith.constant 0 : i32
    %c0_i32_0 = arith.constant 0 : i32
    return %arg0, %c0_i32, %arg1 : i32, i32, i32
  }
  func.func @transform_2(%arg0: i32, %arg1: i32, %arg2: memref<1xi32, #tpu.memory_space<smem>>) -> (i32, i32, i32) {
    %c0_i32 = arith.constant 0 : i32
    %c0_i32_0 = arith.constant 0 : i32
    return %arg0, %c0_i32, %arg1 : i32, i32, i32
  }
  func.func @transform_3(%arg0: i32, %arg1: i32, %arg2: memref<1xi32, #tpu.memory_space<smem>>) -> (i32, i32, i32) {
    %c0_i32 = arith.constant 0 : i32
    %c0_i32_0 = arith.constant 0 : i32
    return %arg0, %c0_i32, %arg1 : i32, i32, i32
  }
}

</mosaic_0001>

<llo_original>
// kernel: tpu_custom_call.1
$region0: #{tpu_custom_call.1}
  #allocation0 [shape = 'u32[]', space=smem, size = 0x4, offset = 0x4, fixed_abs, tag = 'smem constant byte address 0x4 - core index']
  #allocation1 [shape = 'u32[144,128]{1,0:T(1,128)}', space=vmem, size = 0x12000, scoped, tag = 'internal scratch']
  #allocation2 [shape = 's32[1]{0}', space=sflag, size = 0x4, scoped, tag = 'scoped memory for tpu_custom_call.1']
  #allocation3 [shape = 's32[1]{0:T(128)S(6)}', space=smem, size = 0x200, scoped, tag = 'prefetched SMEM operand 0']
  %s0 = inlined_call_operand.<no memory space> [shape: s32[1], index: 0, kind: input, shape index: {}]
  %s1 = inlined_call_operand.vmem [shape: f32[2,1,128], index: 1, kind: input, shape index: {}]
  %s2 = inlined_call_operand.vmem [shape: f32[2,1,128], index: 2, kind: input, shape index: {}]
  %s3 = inlined_call_operand.hbm [shape: f32[2,4,256], index: 3, kind: input, shape index: {}]
  %s4 = inlined_call_operand.hbm [shape: f32[2,4,256], index: 4, kind: output, shape index: {}]
  %s5 = sld [smem:[#allocation0]]
  $region34: #{tpu_custom_call.1} parent=0
    _
  %s7 = ssub.s32 1, %s5
  %s8 = scalar_select 0, %s7, %s5
  %9 = sst [smem:[#allocation3]] %s0
  $region1: #{tpu_custom_call.1} parent=0
    #allocation4 [shape = 'u8[8192]{0}', space=vmem, size = 0x2000, scoped, tag = 'input window, operand 3, single buffered']
    #allocation5 [shape = 's32[1]{0}', space=sflag, size = 0x4, scoped, tag = 'scoped memory for tpu_custom_call.1']
    #allocation6 [shape = 's32[1]{0}', space=sflag, size = 0x4, scoped, tag = 'scoped memory for tpu_custom_call.1']
    #allocation7 [shape = 'u8[8192]{0}', space=vmem, size = 0x2000, scoped, tag = 'output window, operand 0, single buffered']
    %10 = vsyncpa [#allocation5], 0
    %11 = vsyncpa [#allocation6], 0
    // Predicated region
    $region2: #{tpu_custom_call.1} parent=1 // pred_check
      _
    $region3: #{tpu_custom_call.1} parent=1 // pred_check_branch
      %13 = sbr.rel (0) target = $region5
    $region4: #{tpu_custom_call.1} parent=1 // pred_region
      _
    $region5: #{tpu_custom_call.1} parent=1 // pred_fallthru
      _
    // Predicated region
    $region6: #{tpu_custom_call.1} parent=1 // pred_check
      _
    $region7: #{tpu_custom_call.1} parent=1 // pred_check_branch
      %15 = sbr.rel (0) target = $region9
    $region8: #{tpu_custom_call.1} parent=1 // pred_region
      _
    $region9: #{tpu_custom_call.1} parent=1 // pred_fallthru
      _
    // Predicated region
    $region10: #{tpu_custom_call.1} parent=1 // pred_check
      _
    $region11: #{tpu_custom_call.1} parent=1 // pred_check_branch
      %17 = sbr.rel (0) target = $region13
    $region12: #{tpu_custom_call.1} parent=1 // pred_region
      %s19 = ssub.s32 256, 256
      %20 = vsyncadd [#allocation5], %s19
      %s21 = sshll.u32 [#allocation4], 4
      %s22 = int_to_ptr.vmem [resolvable:$true] %s21
      %27 = dma.hbm_to_vmem [thread:$0]  %s3, 256, %s22, [#allocation5], 128, 128, 8
    $region13: #{tpu_custom_call.1} parent=1 // pred_fallthru
      _
    // Predicated region
    $region14: #{tpu_custom_call.1} parent=1 // pred_check
      _
    $region15: #{tpu_custom_call.1} parent=1 // pred_check_branch
      %29 = sbr.rel (0) target = $region17
    $region16: #{tpu_custom_call.1} parent=1 // pred_region
      %30 = dma.done [#allocation5], 256
    $region17: #{tpu_custom_call.1} parent=1 // pred_fallthru
      _
    %s31 = sld [smem:[#allocation3]]
    %p32 = scmp.eq.s32.totalorder %s31, 0
    // Predicated region
    $region18: #{tpu_custom_call.1} parent=1 // pred_check
      %p33 = pneg %p32
    $region19: #{tpu_custom_call.1} parent=1 // pred_check_branch
      %35 = sbr.rel (%p33) target = $region21
    $region20: #{tpu_custom_call.1} parent=1 // pred_region
      %v36 = vld [vmem:[#allocation4] sm:$0xff]
      %v37 = vld [vmem:[#allocation4 + $0x8] sm:$0xff]
      %38 = vst [vmem:[#allocation7] sm:$0xff] %v36
      %39 = vst [vmem:[#allocation7 + $0x8] sm:$0xff] %v37
    $region21: #{tpu_custom_call.1} parent=1 // pred_fallthru
      _
    %s40 = sld [smem:[#allocation3]]
    %p41 = scmp.ne.s32.totalorder %s40, 0
    // Predicated region
    $region22: #{tpu_custom_call.1} parent=1 // pred_check
      %p42 = pneg %p41
    $region23: #{tpu_custom_call.1} parent=1 // pred_check_branch
      %44 = sbr.rel (%p42) target = $region25
    $region24: #{tpu_custom_call.1} parent=1 // pred_region
      %v45 = vld [vmem:[%s1] sm:$0x1]
      %v46 = vld [vmem:[%s1 + $0x1] sm:$0x1]
      %v47 = vsub.f32 1.0, %v45
      %v48 = vsub.f32 1.0, %v46
      %v49 = vld [vmem:[%s2] sm:$0x1]
      %v50 = vld [vmem:[%s2 + $0x1] sm:$0x1]
      %v51 = vlog2.pop %v47
      %v52 = vmul.f32 %v51, 0.6931472
      %v53 = vlog2.pop %v48
      %v54 = vmul.f32 %v53, 0.6931472
      %v55 = vmul.f32 %v52, -2.0
      %v56 = vmul.f32 %v54, -2.0
      %v57 = vrsqrt.pop %v55
      %v58 = vmul.f32 %v55, %v57
      %vm59 = vcmp.eq.f32.partialorder %v55, inf
      %v60 = vsel %vm59, %v55, %v58
      %vm61 = vcmp.eq.f32.partialorder %v55, 0.0
      %v62 = vand.u32 %v55, 2147483648
      %v63 = vsel %vm61, %v62, %v60
      %v64 = vrsqrt.pop %v56
      %v65 = vmul.f32 %v56, %v64
      %vm66 = vcmp.eq.f32.partialorder %v56, inf
      %v67 = vsel %vm66, %v56, %v65
      %vm68 = vcmp.eq.f32.partialorder %v56, 0.0
      %v69 = vand.u32 %v56, 2147483648
      %v70 = vsel %vm68, %v69, %v67
      %v71 = vmul.f32 %v49, 6.2831855
      %v72 = vmul.f32 %v50, 6.2831855
      %v73 = vand.u32 2147483647, %v71
      %vm74 = vcmp.le.f32.partialorder %v73, 0.7853982
      %vm75 = vcmp.lt.s32.totalorder %v71, 0
      %v76 = vand.u32 %v71, 2139095040
      %v77 = vshrl.u32 %v76, 23
      %v78 = vsub.s32 %v77, 127
      %v79 = vand.u32 2147483647, %v71
      %v80 = vand.u32 %v79, 8388607
      %v81 = vor.u32 %v80, 8388608
      %v82 = vsub.s32 0, %v81
      %v83 = vadd.s32 %v78, 1
      %vm84 = vcmp.gt.s32.totalorder %v83, 0
      %v85 = vsel %vm84, %v83, 0
      %v86 = vshrl.u32 %v85, 5
      %v87 = vand.u32 %v85, 31
      %v88 = vsub.s32 32, %v87
      %v89 = vshrl.u32 683565275, %v88
      %v90 = vshll.u32 683565275, %v87
      %v91 = vshrl.u32 2475754826, %v88
      %v92 = vor.u32 %v90, %v91
      %v93 = vshll.u32 2475754826, %v87
      %v94 = vshrl.u32 2131351028, %v88
      %v95 = vor.u32 %v93, %v94
      %v96 = vshll.u32 2131351028, %v87
      %v97 = vshrl.u32 2102212464, %v88
      %v98 = vor.u32 %v96, %v97
      %v99 = vshll.u32 2102212464, %v87
      %v100 = vshrl.u32 920167782, %v88
      %v101 = vor.u32 %v99, %v100
      %v102 = vshll.u32 920167782, %v87
      %v103 = vshrl.u32 1326507024, %v88
      %v104 = vor.u32 %v102, %v103
      %vm105 = vcmp.lt.s32.totalorder %v86, 1
      %vm106 = vcmp.lt.s32.totalorder %v86, 2
      %vm107 = vcmp.lt.s32.totalorder %v86, 3
      %vm108 = vcmp.lt.s32.totalorder %v86, 4
      %v109 = vsel %vm105, %v89, %v92
      %v110 = vsel %vm108, %v98, 2102212464
      %v111 = vsel %vm107, %v95, %v110
      %v112 = vsel %vm106, %v109, %v111
      %v113 = vsel %vm105, %v92, %v95
      %v114 = vsel %vm108, %v101, 920167782
      %v115 = vsel %vm107, %v98, %v114
      %v116 = vsel %vm106, %v113, %v115
      %v117 = vsel %vm105, %v95, %v98
      %v118 = vsel %vm108, %v104, 1326507024
      %v119 = vsel %vm107, %v101, %v118
      %v120 = vsel %vm106, %v117, %v119
      %v121 = vshll.u32 %v81, 8
      %v122 = vmul.u32.u64.compose %v121, %v120
      %v123 = vextract.low.u32 %v122
      %v124 = vextract.high.u32 %v122
      %v125 = vmul.u32.u64.compose %v121, %v116
      %v126 = vextract.low.u32 %v125
      %v127 = vextract.high.u32 %v125
      %v128 = vmul.u32 %v121, %v112
      %v129 = vadd.s32 %v124, %v126
      %vm130 = vc.u32 %v124, %v126
      %v131 = vadd.s32 %v127, 1
      %v132 = vsel %vm130, %v131, %v127
      %v133 = vadd.s32 %v128, %v132
      %v134 = vadd.s32 %v133, 536870912
      %v135 = vshrl.u32 %v134, 30
      %v136 = vshll.u32 %v135, 30
      %v137 = vsub.s32 %v133, %v136
      %vm138 = vcmp.lt.s32.totalorder %v137, 0
      %v139 = vsub.s32 0, %v137
      %v140 = vsel %vm138, %v139, %v137
      %v141 = vclz %v140
      %v142 = vsub.s32 %v141, 2
      %vm143 = vcmp.gt.s32.totalorder 0, %v142
      %v144 = vsel %vm143, 0, %v142
      %v145 = vsub.s32 32, %v144
      %v146 = vshll.u32 %v137, %v144
      %v147 = vshrl.u32 %v129, %v145
      %v148 = vor.u32 %v146, %v147
      %v149 = vsub.s32 4294967266, %v144
      %v150 = vadd.s32 %v149, 127
      %v151 = vshll.u32 %v150, 23
      %v152 = vor.u32 4788187, %v151
      %v153 = vand.u32 2147483647, %v152
      %v155 = vcvt.s32.f32 %v148
      %v156 = vmul.f32 %v155, %v153
      %v157 = vxor.u32 %v156, 2147483648
      %v158 = vsel %vm75, %v157, %v156
      %v159 = vsub.s32 4, %v135
      %v160 = vsel %vm75, %v159, %v135
      %v161 = vsel %vm74, %v71, %v158
      %v162 = vsel %vm74, 0, %v160
      %v163 = vcosq.f32.pop %v161
      %v164 = vsinq.f32.pop %v161
      %vm165 = vweird.f32 %v71
      %v166 = vand.u32 %v162, 3
      %vm167 = vcmp.lt.s32.totalorder %v166, 2
      %vm168 = vcmp.eq.s32.totalorder %v166, 0
      %v169 = vxor.u32 %v164, 2147483648
      %v170 = vsel %vm168, %v163, %v169
      %vm171 = vcmp.eq.s32.totalorder %v166, 2
      %v172 = vxor.u32 %v163, 2147483648
      %v173 = vsel %vm171, %v172, %v164
      %v174 = vsel %vm167, %v170, %v173
      %v175 = vsel %vm165, nan, %v174
      %v176 = vand.u32 2147483647, %v72
      %vm177 = vcmp.le.f32.partialorder %v176, 0.7853982
      %vm178 = vcmp.lt.s32.totalorder %v72, 0
      %v179 = vand.u32 %v72, 2139095040
      %v180 = vshrl.u32 %v179, 23
      %v181 = vsub.s32 %v180, 127
      %v182 = vand.u32 2147483647, %v72
      %v183 = vand.u32 %v182, 8388607
      %v184 = vor.u32 %v183, 8388608
      %v185 = vsub.s32 0, %v184
      %v186 = vadd.s32 %v181, 1
      %vm187 = vcmp.gt.s32.totalorder %v186, 0
      %v188 = vsel %vm187, %v186, 0
      %v189 = vshrl.u32 %v188, 5
      %v190 = vand.u32 %v188, 31
      %v191 = vsub.s32 32, %v190
      %v192 = vshrl.u32 683565275, %v191
      %v193 = vshll.u32 683565275, %v190
      %v194 = vshrl.u32 2475754826, %v191
      %v195 = vor.u32 %v193, %v194
      %v196 = vshll.u32 2475754826, %v190
      %v197 = vshrl.u32 2131351028, %v191
      %v198 = vor.u32 %v196, %v197
      %v199 = vshll.u32 2131351028, %v190
      %v200 = vshrl.u32 2102212464, %v191
      %v201 = vor.u32 %v199, %v200
      %v202 = vshll.u32 2102212464, %v190
      %v203 = vshrl.u32 920167782, %v191
      %v204 = vor.u32 %v202, %v203
      %v205 = vshll.u32 920167782, %v190
      %v206 = vshrl.u32 1326507024, %v191
      %v207 = vor.u32 %v205, %v206
      %vm208 = vcmp.lt.s32.totalorder %v189, 1
      %vm209 = vcmp.lt.s32.totalorder %v189, 2
      %vm210 = vcmp.lt.s32.totalorder %v189, 3
      %vm211 = vcmp.lt.s32.totalorder %v189, 4
      %v212 = vsel %vm208, %v192, %v195
      %v213 = vsel %vm211, %v201, 2102212464
      %v214 = vsel %vm210, %v198, %v213
      %v215 = vsel %vm209, %v212, %v214
      %v216 = vsel %vm208, %v195, %v198
      %v217 = vsel %vm211, %v204, 920167782
      %v218 = vsel %vm210, %v201, %v217
      %v219 = vsel %vm209, %v216, %v218
      %v220 = vsel %vm208, %v198, %v201
      %v221 = vsel %vm211, %v207, 1326507024
      %v222 = vsel %vm210, %v204, %v221
      %v223 = vsel %vm209, %v220, %v222
      %v224 = vshll.u32 %v184, 8
      %v225 = vmul.u32.u64.compose %v224, %v223
      %v226 = vextract.low.u32 %v225
      %v227 = vextract.high.u32 %v225
      %v228 = vmul.u32.u64.compose %v224, %v219
      %v229 = vextract.low.u32 %v228
      %v230 = vextract.high.u32 %v228
      %v231 = vmul.u32 %v224, %v215
      %v232 = vadd.s32 %v227, %v229
      %vm233 = vc.u32 %v227, %v229
      %v234 = vadd.s32 %v230, 1
      %v235 = vsel %vm233, %v234, %v230
      %v236 = vadd.s32 %v231, %v235
      %v237 = vadd.s32 %v236, 536870912
      %v238 = vshrl.u32 %v237, 30
      %v239 = vshll.u32 %v238, 30
      %v240 = vsub.s32 %v236, %v239
      %vm241 = vcmp.lt.s32.totalorder %v240, 0
      %v242 = vsub.s32 0, %v240
      %v243 = vsel %vm241, %v242, %v240
      %v244 = vclz %v243
      %v245 = vsub.s32 %v244, 2
      %vm246 = vcmp.gt.s32.totalorder 0, %v245
      %v247 = vsel %vm246, 0, %v245
      %v248 = vsub.s32 32, %v247
      %v249 = vshll.u32 %v240, %v247
      %v250 = vshrl.u32 %v232, %v248
      %v251 = vor.u32 %v249, %v250
      %v252 = vsub.s32 4294967266, %v247
      %v253 = vadd.s32 %v252, 127
      %v254 = vshll.u32 %v253, 23
      %v255 = vor.u32 4788187, %v254
      %v256 = vand.u32 2147483647, %v255
      %v258 = vcvt.s32.f32 %v251
      %v259 = vmul.f32 %v258, %v256
      %v260 = vxor.u32 %v259, 2147483648
      %v261 = vsel %vm178, %v260, %v259
      %v262 = vsub.s32 4, %v238
      %v263 = vsel %vm178, %v262, %v238
      %v264 = vsel %vm177, %v72, %v261
      %v265 = vsel %vm177, 0, %v263
      %v266 = vcosq.f32.pop %v264
      %v267 = vsinq.f32.pop %v264
      %vm268 = vweird.f32 %v72
      %v269 = vand.u32 %v265, 3
      %vm270 = vcmp.lt.s32.totalorder %v269, 2
      %vm271 = vcmp.eq.s32.totalorder %v269, 0
      %v272 = vxor.u32 %v267, 2147483648
      %v273 = vsel %vm271, %v266, %v272
      %vm274 = vcmp.eq.s32.totalorder %v269, 2
      %v275 = vxor.u32 %v266, 2147483648
      %v276 = vsel %vm274, %v275, %v267
      %v277 = vsel %vm270, %v273, %v276
      %v278 = vsel %vm268, nan, %v277
      %v279 = vmul.f32 %v63, %v175
      %v280 = vmul.f32 %v70, %v278
      %v281 = vand.u32 2147483647, %v71
      %vm282 = vcmp.le.f32.partialorder %v281, 0.7853982
      %vm283 = vcmp.lt.s32.totalorder %v71, 0
      %v284 = vand.u32 %v71, 2139095040
      %v285 = vshrl.u32 %v284, 23
      %v286 = vsub.s32 %v285, 127
      %v287 = vand.u32 2147483647, %v71
      %v288 = vand.u32 %v287, 8388607
      %v289 = vor.u32 %v288, 8388608
      %v290 = vsub.s32 0, %v289
      %v291 = vadd.s32 %v286, 1
      %vm292 = vcmp.gt.s32.totalorder %v291, 0
      %v293 = vsel %vm292, %v291, 0
      %v294 = vshrl.u32 %v293, 5
      %v295 = vand.u32 %v293, 31
      %v296 = vsub.s32 32, %v295
      %v297 = vshrl.u32 683565275, %v296
      %v298 = vshll.u32 683565275, %v295
      %v299 = vshrl.u32 2475754826, %v296
      %v300 = vor.u32 %v298, %v299
      %v301 = vshll.u32 2475754826, %v295
      %v302 = vshrl.u32 2131351028, %v296
      %v303 = vor.u32 %v301, %v302
      %v304 = vshll.u32 2131351028, %v295
      %v305 = vshrl.u32 2102212464, %v296
      %v306 = vor.u32 %v304, %v305
      %v307 = vshll.u32 2102212464, %v295
      %v308 = vshrl.u32 920167782, %v296
      %v309 = vor.u32 %v307, %v308
      %v310 = vshll.u32 920167782, %v295
      %v311 = vshrl.u32 1326507024, %v296
      %v312 = vor.u32 %v310, %v311
      %vm313 = vcmp.lt.s32.totalorder %v294, 1
      %vm314 = vcmp.lt.s32.totalorder %v294, 2
      %vm315 = vcmp.lt.s32.totalorder %v294, 3
      %vm316 = vcmp.lt.s32.totalorder %v294, 4
      %v317 = vsel %vm313, %v297, %v300
      %v318 = vsel %vm316, %v306, 2102212464
      %v319 = vsel %vm315, %v303, %v318
      %v320 = vsel %vm314, %v317, %v319
      %v321 = vsel %vm313, %v300, %v303
      %v322 = vsel %vm316, %v309, 920167782
      %v323 = vsel %vm315, %v306, %v322
      %v324 = vsel %vm314, %v321, %v323
      %v325 = vsel %vm313, %v303, %v306
      %v326 = vsel %vm316, %v312, 1326507024
      %v327 = vsel %vm315, %v309, %v326
      %v328 = vsel %vm314, %v325, %v327
      %v329 = vshll.u32 %v289, 8
      %v330 = vmul.u32.u64.compose %v329, %v328
      %v331 = vextract.low.u32 %v330
      %v332 = vextract.high.u32 %v330
      %v333 = vmul.u32.u64.compose %v329, %v324
      %v334 = vextract.low.u32 %v333
      %v335 = vextract.high.u32 %v333
      %v336 = vmul.u32 %v329, %v320
      %v337 = vadd.s32 %v332, %v334
      %vm338 = vc.u32 %v332, %v334
      %v339 = vadd.s32 %v335, 1
      %v340 = vsel %vm338, %v339, %v335
      %v341 = vadd.s32 %v336, %v340
      %v342 = vadd.s32 %v341, 536870912
      %v343 = vshrl.u32 %v342, 30
      %v344 = vshll.u32 %v343, 30
      %v345 = vsub.s32 %v341, %v344
      %vm346 = vcmp.lt.s32.totalorder %v345, 0
      %v347 = vsub.s32 0, %v345
      %v348 = vsel %vm346, %v347, %v345
      %v349 = vclz %v348
      %v350 = vsub.s32 %v349, 2
      %vm351 = vcmp.gt.s32.totalorder 0, %v350
      %v352 = vsel %vm351, 0, %v350
      %v353 = vsub.s32 32, %v352
      %v354 = vshll.u32 %v345, %v352
      %v355 = vshrl.u32 %v337, %v353
      %v356 = vor.u32 %v354, %v355
      %v357 = vsub.s32 4294967266, %v352
      %v358 = vadd.s32 %v357, 127
      %v359 = vshll.u32 %v358, 23
      %v360 = vor.u32 4788187, %v359
      %v361 = vand.u32 2147483647, %v360
      %v363 = vcvt.s32.f32 %v356
      %v364 = vmul.f32 %v363, %v361
      %v365 = vxor.u32 %v364, 2147483648
      %v366 = vsel %vm283, %v365, %v364
      %v367 = vsub.s32 4, %v343
      %v368 = vsel %vm283, %v367, %v343
      %v369 = vsel %vm282, %v71, %v366
      %v370 = vsel %vm282, 0, %v368
      %v371 = vcosq.f32.pop %v369
      %v372 = vsinq.f32.pop %v369
      %vm373 = vweird.f32 %v71
      %v374 = vadd.s32 %v370, 3
      %v375 = vand.u32 %v374, 3
      %vm376 = vcmp.lt.s32.totalorder %v375, 2
      %vm377 = vcmp.eq.s32.totalorder %v375, 0
      %v378 = vxor.u32 %v372, 2147483648
      %v379 = vsel %vm377, %v371, %v378
      %vm380 = vcmp.eq.s32.totalorder %v375, 2
      %v381 = vxor.u32 %v371, 2147483648
      %v382 = vsel %vm380, %v381, %v372
      %v383 = vsel %vm376, %v379, %v382
      %v384 = vsel %vm373, nan, %v383
      %v385 = vand.u32 2147483647, %v72
      %vm386 = vcmp.le.f32.partialorder %v385, 0.7853982
      %vm387 = vcmp.lt.s32.totalorder %v72, 0
      %v388 = vand.u32 %v72, 2139095040
      %v389 = vshrl.u32 %v388, 23
      %v390 = vsub.s32 %v389, 127
      %v391 = vand.u32 2147483647, %v72
      %v392 = vand.u32 %v391, 8388607
      %v393 = vor.u32 %v392, 8388608
      %v394 = vsub.s32 0, %v393
      %v395 = vadd.s32 %v390, 1
      %vm396 = vcmp.gt.s32.totalorder %v395, 0
      %v397 = vsel %vm396, %v395, 0
      %v398 = vshrl.u32 %v397, 5
      %v399 = vand.u32 %v397, 31
      %v400 = vsub.s32 32, %v399
      %v401 = vshrl.u32 683565275, %v400
      %v402 = vshll.u32 683565275, %v399
      %v403 = vshrl.u32 2475754826, %v400
      %v404 = vor.u32 %v402, %v403
      %v405 = vshll.u32 2475754826, %v399
      %v406 = vshrl.u32 2131351028, %v400
      %v407 = vor.u32 %v405, %v406
      %v408 = vshll.u32 2131351028, %v399
      %v409 = vshrl.u32 2102212464, %v400
      %v410 = vor.u32 %v408, %v409
      %v411 = vshll.u32 2102212464, %v399
      %v412 = vshrl.u32 920167782, %v400
      %v413 = vor.u32 %v411, %v412
      %v414 = vshll.u32 920167782, %v399
      %v415 = vshrl.u32 1326507024, %v400
      %v416 = vor.u32 %v414, %v415
      %vm417 = vcmp.lt.s32.totalorder %v398, 1
      %vm418 = vcmp.lt.s32.totalorder %v398, 2
      %vm419 = vcmp.lt.s32.totalorder %v398, 3
      %vm420 = vcmp.lt.s32.totalorder %v398, 4
      %v421 = vsel %vm417, %v401, %v404
      %v422 = vsel %vm420, %v410, 2102212464
      %v423 = vsel %vm419, %v407, %v422
      %v424 = vsel %vm418, %v421, %v423
      %v425 = vsel %vm417, %v404, %v407
      %v426 = vsel %vm420, %v413, 920167782
      %v427 = vsel %vm419, %v410, %v426
      %v428 = vsel %vm418, %v425, %v427
      %v429 = vsel %vm417, %v407, %v410
      %v430 = vsel %vm420, %v416, 1326507024
      %v431 = vsel %vm419, %v413, %v430
      %v432 = vsel %vm418, %v429, %v431
      %v433 = vshll.u32 %v393, 8
      %v434 = vmul.u32.u64.compose %v433, %v432
      %v435 = vextract.low.u32 %v434
      %v436 = vextract.high.u32 %v434
      %v437 = vmul.u32.u64.compose %v433, %v428
      %v438 = vextract.low.u32 %v437
      %v439 = vextract.high.u32 %v437
      %v440 = vmul.u32 %v433, %v424
      %v441 = vadd.s32 %v436, %v438
      %vm442 = vc.u32 %v436, %v438
      %v443 = vadd.s32 %v439, 1
      %v444 = vsel %vm442, %v443, %v439
      %v445 = vadd.s32 %v440, %v444
      %v446 = vadd.s32 %v445, 536870912
      %v447 = vshrl.u32 %v446, 30
      %v448 = vshll.u32 %v447, 30
      %v449 = vsub.s32 %v445, %v448
      %vm450 = vcmp.lt.s32.totalorder %v449, 0
      %v451 = vsub.s32 0, %v449
      %v452 = vsel %vm450, %v451, %v449
      %v453 = vclz %v452
      %v454 = vsub.s32 %v453, 2
      %vm455 = vcmp.gt.s32.totalorder 0, %v454
      %v456 = vsel %vm455, 0, %v454
      %v457 = vsub.s32 32, %v456
      %v458 = vshll.u32 %v449, %v456
      %v459 = vshrl.u32 %v441, %v457
      %v460 = vor.u32 %v458, %v459
      %v461 = vsub.s32 4294967266, %v456
      %v462 = vadd.s32 %v461, 127
      %v463 = vshll.u32 %v462, 23
      %v464 = vor.u32 4788187, %v463
      %v465 = vand.u32 2147483647, %v464
      %v467 = vcvt.s32.f32 %v460
      %v468 = vmul.f32 %v467, %v465
      %v469 = vxor.u32 %v468, 2147483648
      %v470 = vsel %vm387, %v469, %v468
      %v471 = vsub.s32 4, %v447
      %v472 = vsel %vm387, %v471, %v447
      %v473 = vsel %vm386, %v72, %v470
      %v474 = vsel %vm386, 0, %v472
      %v475 = vcosq.f32.pop %v473
      %v476 = vsinq.f32.pop %v473
      %vm477 = vweird.f32 %v72
      %v478 = vadd.s32 %v474, 3
      %v479 = vand.u32 %v478, 3
      %vm480 = vcmp.lt.s32.totalorder %v479, 2
      %vm481 = vcmp.eq.s32.totalorder %v479, 0
      %v482 = vxor.u32 %v476, 2147483648
      %v483 = vsel %vm481, %v475, %v482
      %vm484 = vcmp.eq.s32.totalorder %v479, 2
      %v485 = vxor.u32 %v475, 2147483648
      %v486 = vsel %vm484, %v485, %v476
      %v487 = vsel %vm480, %v483, %v486
      %v488 = vsel %vm477, nan, %v487
      %v489 = vmul.f32 %v63, %v384
      %v490 = vmul.f32 %v70, %v488
      %v491 = vld [vmem:[#allocation4] sm:$0xff]
      %v492 = vld [vmem:[#allocation4 + $0x8] sm:$0xff]
      %v493 = vmul.f32 %v279, 0.005
      %v494 = vmul.f32 %v489, 0.005
      %v495 = vmul.f32 %v280, 0.005
      %v496 = vmul.f32 %v490, 0.005
      %v497 = vlaneseq
      %v498 = vshrl.u32 %v497, 7
      %v499 = vsub.s32 0, %v498
      %v500 = vrot.slane %v493, %v499
      %v501 = vlaneseq
      %v502 = vshrl.u32 %v501, 7
      %v503 = vsub.s32 0, %v502
      %v504 = vrot.slane %v494, %v503
      %v505 = vlaneseq
      %v506 = vshrl.u32 %v505, 7
      %v507 = vsub.s32 0, %v506
      %v508 = vrot.slane %v495, %v507
      %v509 = vlaneseq
      %v510 = vshrl.u32 %v509, 7
      %v511 = vsub.s32 0, %v510
      %v512 = vrot.slane %v496, %v511
      %v517 = vcombine.low %v500, %v504
      %v518 = vcombine.low %v508, %v512
      %v521 = vadd.f32 %v491, %v517
      %v522 = vadd.f32 %v492, %v518
      %523 = vst [vmem:[#allocation7] sm:$0xff] %v521
      %524 = vst [vmem:[#allocation7 + $0x8] sm:$0xff] %v522
    $region25: #{tpu_custom_call.1} parent=1 // pred_fallthru
      _
    // Predicated region
    $region26: #{tpu_custom_call.1} parent=1 // pred_check
      _
    $region27: #{tpu_custom_call.1} parent=1 // pred_check_branch
      %526 = sbr.rel (0) target = $region29
    $region28: #{tpu_custom_call.1} parent=1 // pred_region
      %s528 = ssub.s32 256, 256
      %529 = vsyncadd [#allocation6], %s528
      %s530 = sshll.u32 [#allocation7], 4
      %s531 = int_to_ptr.vmem [resolvable:$true] %s530
      %536 = dma.vmem_to_hbm [thread:$0]  %s531, 256, %s4, [#allocation6], 128, 128, 8
    $region29: #{tpu_custom_call.1} parent=1 // pred_fallthru
      _
    // Predicated region
    $region30: #{tpu_custom_call.1} parent=1 // pred_check
      _
    $region31: #{tpu_custom_call.1} parent=1 // pred_check_branch
      %538 = sbr.rel (0) target = $region33
    $region32: #{tpu_custom_call.1} parent=1 // pred_region
      %539 = dma.done [#allocation6], 256
    $region33: #{tpu_custom_call.1} parent=1 // pred_fallthru
      _
    %540 = vsyncpa [#allocation5], 1
    %541 = vsyncpa [#allocation6], 1

</llo_original>
